<compile_context>
chip_gen: v7x
topology: tpu7x:2x2x1
jax: 0.10.0
libtpu: 0.0.40
codegen_flags: <defaults>
</compile_context>

<pallas_src>
import functools

import jax
import jax.numpy as jnp
from jax import lax
from jax.experimental import pallas as pl
from jax.experimental.pallas import tpu as pltpu  # noqa: F401  (TPU backend assumed)


# ----------------------------------------------------------------------------
# Fused kernel:
#   feature_gen MLP:  Linear(noise,128)->ReLU->Linear(128,256)->ReLU
#                     ->Linear(256, N*F)->Tanh
#   unflatten (1,N*F)->(N,F) via MXU selection matmul
#   cosine adjacency: normalize rows, Gram, threshold, zero diag, row-normalize
# ----------------------------------------------------------------------------
def fused_generator_kernel(
    z_ref, w1_ref, b1_ref, w2_ref, b2_ref, w3_ref, b3_ref, unflat_ref,
    feat_ref, adj_ref, *, num_nodes, feature_dim, threshold,
):
    n = num_nodes
    f = feature_dim
    nf = n * f

    # ---- feature_gen MLP (all three dots hit the MXU, f32 accumulate) ----
    z = z_ref[...]                                                        # (1, D)
    h1 = jnp.dot(z, w1_ref[...], preferred_element_type=jnp.float32) + b1_ref[...]
    h1 = jnp.maximum(h1, 0.0)                                             # ReLU
    h2 = jnp.dot(h1, w2_ref[...], preferred_element_type=jnp.float32) + b2_ref[...]
    h2 = jnp.maximum(h2, 0.0)                                             # ReLU
    h3 = jnp.dot(h2, w3_ref[...], preferred_element_type=jnp.float32) + b3_ref[...]
    flat = jnp.tanh(h3)                                                   # (1, N*F)

    # ---- exact (1, N*F) -> (N, F) unflatten, done on the MXU ----
    # blocked[i, m] = flat[m] if m lies in node i's F-wide block, else 0
    row = lax.broadcasted_iota(jnp.int32, (n, nf), 0)
    col = lax.broadcasted_iota(jnp.int32, (n, nf), 1)
    in_block = (col >= row * f) & (col < row * f + f)
    blocked = jnp.where(in_block, jnp.broadcast_to(flat, (n, nf)), 0.0)   # (N, N*F)
    # unflat_ref is a tiled identity (N*F, F): features[i, k] == flat[i*F + k] exactly.
    features = jnp.dot(blocked, unflat_ref[...],
                       preferred_element_type=jnp.float32)                # (N, F)
    feat_ref[...] = features

    # ---- cosine-similarity adjacency + row normalization ----
    # F.normalize(p=2, dim=1, eps=1e-12)  ==  x * rsqrt(max(||x||^2, 1e-24))
    sq = jnp.sum(features * features, axis=1, keepdims=True)              # (N, 1)
    normed = features * lax.rsqrt(jnp.maximum(sq, 1e-24))

    # sim = normed @ normed.T without materializing the transpose
    sim = lax.dot_general(normed, normed,
                          dimension_numbers=(((1,), (1,)), ((), ())),
                          preferred_element_type=jnp.float32)             # (N, N)

    # (sim > threshold) and zero-diagonal in a single select
    ri = lax.broadcasted_iota(jnp.int32, (n, n), 0)
    ci = lax.broadcasted_iota(jnp.int32, (n, n), 1)
    adj = jnp.where((sim > threshold) & (ri != ci), 1.0, 0.0)

    # adj / adj.sum(1, keepdim=True).clamp(min=1)   (exact reciprocal keeps rows stochastic)
    row_sum = jnp.maximum(jnp.sum(adj, axis=1, keepdims=True), 1.0)       # (N, 1)
    adj_ref[...] = adj * pl.reciprocal(row_sum)


# ----------------------------------------------------------------------------
# Wrapper (jit'ed: tiled-eye + reshapes constant-fold; single fused pallas_call)
# ----------------------------------------------------------------------------
def _full_spec(shape):
    return pl.BlockSpec(shape, lambda: (0,) * len(shape))


@functools.partial(jax.jit, static_argnames=("num_nodes", "feature_dim", "threshold"))
def graph_generator_forward(z, params, *, num_nodes, feature_dim, threshold=0.1):
    """Equivalent of GraphGenerator.forward (generator_type='cosine').

    z: (noise_dim,) float32 noise vector.
    Returns: (features (N, F), adj (N, N)) from a single fused pallas_call.
    """
    w1, b1, w2, b2, w3, b3 = (
        params["w1"], params["b1"], params["w2"], params["b2"], params["w3"], params["b3"],
    )
    noise_dim = z.shape[0]

    z2 = z.reshape(1, noise_dim).astype(jnp.float32)
    b1r = b1.reshape(1, -1)
    b2r = b2.reshape(1, -1)
    b3r = b3.reshape(1, -1)
    # (N*F, F) tiled-identity selection matrix used by the in-kernel MXU unflatten.
    # Built under jit -> folded to a constant; tiny (N*F*F*4 bytes).
    unflat = jnp.tile(jnp.eye(feature_dim, dtype=jnp.float32), (num_nodes, 1))

    kernel = functools.partial(
        fused_generator_kernel,
        num_nodes=num_nodes, feature_dim=feature_dim, threshold=float(threshold),
    )

    features, adj = pl.pallas_call(
        kernel,
        out_shape=(
            jax.ShapeDtypeStruct((num_nodes, feature_dim), jnp.float32),
            jax.ShapeDtypeStruct((num_nodes, num_nodes), jnp.float32),
        ),
        in_specs=[
            _full_spec(z2.shape),
            _full_spec(w1.shape), _full_spec(b1r.shape),
            _full_spec(w2.shape), _full_spec(b2r.shape),
            _full_spec(w3.shape), _full_spec(b3r.shape),
            _full_spec(unflat.shape),
        ],
        out_specs=(
            _full_spec((num_nodes, feature_dim)),
            _full_spec((num_nodes, num_nodes)),
        ),
    )(z2, w1, b1r, w2, b2r, w3, b3r, unflat)

    return features, adj


# ----------------------------------------------------------------------------
# Deterministic parameter init (shapes match the nn.Linear layers in __init__)
# ----------------------------------------------------------------------------
def init_params(key, noise_dim, num_nodes, feature_dim):
    nf = num_nodes * feature_dim
    ks = jax.random.split(key, 6)

    def lin(kw, kb, fan_in, fan_out):
        bound = 1.0 / jnp.sqrt(fan_in)
        w = jax.random.uniform(kw, (fan_in, fan_out), jnp.float32, -bound, bound)
        b = jax.random.uniform(kb, (fan_out,), jnp.float32, -bound, bound)
        return w, b

    w1, b1 = lin(ks[0], ks[1], noise_dim, 128)
    w2, b2 = lin(ks[2], ks[3], 128, 256)
    w3, b3 = lin(ks[4], ks[5], 256, nf)
    return {"w1": w1, "b1": b1, "w2": w2, "b2": b2, "w3": w3, "b3": b3}
    # TODO(synk): 'full_param' generator branch (structure_gen MLP) not implemented;
    # only the default 'cosine' generator_type is covered.


if __name__ == "__main__":
    noise_dim = 32
    num_nodes = 16
    feature_dim = 8
    threshold = 0.1

    key = jax.random.PRNGKey(0)
    k_param, k_z = jax.random.split(key)
    params = init_params(k_param, noise_dim, num_nodes, feature_dim)
    z = jax.random.normal(k_z, (noise_dim,), jnp.float32)

    features, adj = graph_generator_forward(
        z, params, num_nodes=num_nodes, feature_dim=feature_dim, threshold=threshold
    )
    features = jax.block_until_ready(features)
    adj = jax.block_until_ready(adj)

    assert features.shape == (num_nodes, feature_dim)
    assert adj.shape == (num_nodes, num_nodes)
    assert bool(jnp.all(jnp.isfinite(features)))
    assert bool(jnp.all(jnp.isfinite(adj)))
    # tanh range, zero diagonal, and row-stochastic (or all-zero) rows
    assert bool(jnp.max(jnp.abs(features)) <= 1.0 + 1e-6)
    assert bool(jnp.all(jnp.diag(adj) == 0.0))
    assert bool(jnp.all(jnp.sum(adj, axis=1) <= 1.0 + 1e-5))

    print("KERNEL_OK")
</pallas_src>

<mosaic_0001>
module attributes {stable_mosaic.version = 11 : i64} {
  func.func @fused_generator_kernel(%arg0: memref<1x32xf32, #tpu.memory_space<vmem>>, %arg1: memref<32x128xf32, #tpu.memory_space<vmem>>, %arg2: memref<1x128xf32, #tpu.memory_space<vmem>>, %arg3: memref<128x256xf32, #tpu.memory_space<vmem>>, %arg4: memref<1x256xf32, #tpu.memory_space<vmem>>, %arg5: memref<256x128xf32, #tpu.memory_space<vmem>>, %arg6: memref<1x128xf32, #tpu.memory_space<vmem>>, %arg7: memref<128x8xf32, #tpu.memory_space<vmem>>, %arg8: memref<16x8xf32, #tpu.memory_space<vmem>>, %arg9: memref<16x16xf32, #tpu.memory_space<vmem>>) attributes {dimension_semantics = [], scalar_prefetch = 0 : i64, scratch_operands = 0 : i64, tpu.core_type = #tpu.core_type<tc>} {
    %c0 = arith.constant 0 : index
    %c0_0 = arith.constant 0 : index
    %0 = vector.load %arg0[%c0, %c0_0] : memref<1x32xf32, #tpu.memory_space<vmem>>, vector<1x32xf32>
    %c0_1 = arith.constant 0 : index
    %c0_2 = arith.constant 0 : index
    %1 = vector.load %arg1[%c0_1, %c0_2] : memref<32x128xf32, #tpu.memory_space<vmem>>, vector<32x128xf32>
    %cst = arith.constant dense<0.000000e+00> : vector<1x128xf32>
    %2 = tpu.matmul %0, %1, %cst {dimension_numbers = #tpu.dot_dimension_numbers<[1], [0], [0], [1], [0, 0, 1, 1], [], []>} : vector<1x32xf32>, vector<32x128xf32>, vector<1x128xf32> -> vector<1x128xf32>
    %c0_3 = arith.constant 0 : index
    %c0_4 = arith.constant 0 : index
    %3 = vector.load %arg2[%c0_3, %c0_4] : memref<1x128xf32, #tpu.memory_space<vmem>>, vector<1x128xf32>
    %4 = arith.addf %2, %3 : vector<1x128xf32>
    %cst_5 = arith.constant 0.000000e+00 : f32
    %5 = vector.broadcast %cst_5 : f32 to vector<1x128xf32>
    %6 = arith.maximumf %4, %5 : vector<1x128xf32>
    %c0_6 = arith.constant 0 : index
    %c0_7 = arith.constant 0 : index
    %7 = vector.load %arg3[%c0_6, %c0_7] : memref<128x256xf32, #tpu.memory_space<vmem>>, vector<128x256xf32>
    %cst_8 = arith.constant dense<0.000000e+00> : vector<1x256xf32>
    %8 = tpu.matmul %6, %7, %cst_8 {dimension_numbers = #tpu.dot_dimension_numbers<[1], [0], [0], [1], [0, 0, 1, 1], [], []>} : vector<1x128xf32>, vector<128x256xf32>, vector<1x256xf32> -> vector<1x256xf32>
    %c0_9 = arith.constant 0 : index
    %c0_10 = arith.constant 0 : index
    %9 = vector.load %arg4[%c0_9, %c0_10] : memref<1x256xf32, #tpu.memory_space<vmem>>, vector<1x256xf32>
    %10 = arith.addf %8, %9 : vector<1x256xf32>
    %cst_11 = arith.constant 0.000000e+00 : f32
    %11 = vector.broadcast %cst_11 : f32 to vector<1x256xf32>
    %12 = arith.maximumf %10, %11 : vector<1x256xf32>
    %c0_12 = arith.constant 0 : index
    %c0_13 = arith.constant 0 : index
    %13 = vector.load %arg5[%c0_12, %c0_13] : memref<256x128xf32, #tpu.memory_space<vmem>>, vector<256x128xf32>
    %cst_14 = arith.constant dense<0.000000e+00> : vector<1x128xf32>
    %14 = tpu.matmul %12, %13, %cst_14 {dimension_numbers = #tpu.dot_dimension_numbers<[1], [0], [0], [1], [0, 0, 1, 1], [], []>} : vector<1x256xf32>, vector<256x128xf32>, vector<1x128xf32> -> vector<1x128xf32>
    %c0_15 = arith.constant 0 : index
    %c0_16 = arith.constant 0 : index
    %15 = vector.load %arg6[%c0_15, %c0_16] : memref<1x128xf32, #tpu.memory_space<vmem>>, vector<1x128xf32>
    %16 = arith.addf %14, %15 : vector<1x128xf32>
    %17 = math.tanh %16 : vector<1x128xf32>
    %18 = tpu.iota {dimensions = array<i32: 0>} : vector<16x128xi32>
    %19 = tpu.iota {dimensions = array<i32: 1>} : vector<16x128xi32>
    %c8_i32 = arith.constant 8 : i32
    %20 = vector.broadcast %c8_i32 : i32 to vector<16x128xi32>
    %21 = arith.muli %18, %20 : vector<16x128xi32>
    %22 = arith.cmpi sge, %19, %21 : vector<16x128xi32>
    %c8_i32_17 = arith.constant 8 : i32
    %23 = vector.broadcast %c8_i32_17 : i32 to vector<16x128xi32>
    %24 = arith.muli %18, %23 : vector<16x128xi32>
    %c8_i32_18 = arith.constant 8 : i32
    %25 = vector.broadcast %c8_i32_18 : i32 to vector<16x128xi32>
    %26 = arith.addi %24, %25 : vector<16x128xi32>
    %27 = arith.cmpi slt, %19, %26 : vector<16x128xi32>
    %28 = arith.andi %22, %27 : vector<16x128xi1>
    %29 = vector.shape_cast %17 : vector<1x128xf32> to vector<1x128xf32>
    %30 = vector.broadcast %29 : vector<1x128xf32> to vector<16x128xf32>
    %cst_19 = arith.constant 0.000000e+00 : f32
    %31 = vector.broadcast %cst_19 : f32 to vector<16x128xf32>
    %32 = arith.select %28, %30, %31 : vector<16x128xi1>, vector<16x128xf32>
    %c0_20 = arith.constant 0 : index
    %c0_21 = arith.constant 0 : index
    %33 = vector.load %arg7[%c0_20, %c0_21] : memref<128x8xf32, #tpu.memory_space<vmem>>, vector<128x8xf32>
    %cst_22 = arith.constant dense<0.000000e+00> : vector<16x8xf32>
    %34 = tpu.matmul %32, %33, %cst_22 {dimension_numbers = #tpu.dot_dimension_numbers<[1], [0], [0], [1], [0, 0, 1, 1], [], []>} : vector<16x128xf32>, vector<128x8xf32>, vector<16x8xf32> -> vector<16x8xf32>
    %c0_23 = arith.constant 0 : index
    %c0_24 = arith.constant 0 : index
    %35 = vector.load %arg8[%c0_23, %c0_24] : memref<16x8xf32, #tpu.memory_space<vmem>>, vector<16x8xf32>
    tpu.vector_store %arg8[%c0_23, %c0_24], %34 {strides = array<i32>} : memref<16x8xf32, #tpu.memory_space<vmem>>, vector<16x8xf32>,
    %36 = arith.mulf %34, %34 : vector<16x8xf32>
    %cst_25 = arith.constant dense<0.000000e+00> : vector<16xf32>
    %37 = vector.multi_reduction <add>, %36, %cst_25 [1] : vector<16x8xf32> to vector<16xf32>
    %38 = vector.shape_cast %37 : vector<16xf32> to vector<16x1xf32>
    %cst_26 = arith.constant 1.000000e-24 : f32
    %39 = vector.broadcast %cst_26 : f32 to vector<16x1xf32>
    %40 = arith.maximumf %38, %39 : vector<16x1xf32>
    %41 = math.rsqrt %40 : vector<16x1xf32>
    %42 = vector.broadcast %41 : vector<16x1xf32> to vector<16x8xf32>
    %43 = arith.mulf %34, %42 : vector<16x8xf32>
    %cst_27 = arith.constant dense<0.000000e+00> : vector<16x16xf32>
    %44 = tpu.matmul %43, %43, %cst_27 {dimension_numbers = #tpu.dot_dimension_numbers<[1], [1], [0], [0], [0, 0, 1, 0], [], []>} : vector<16x8xf32>, vector<16x8xf32>, vector<16x16xf32> -> vector<16x16xf32>
    %45 = tpu.iota {dimensions = array<i32: 0>} : vector<16x16xi32>
    %46 = tpu.iota {dimensions = array<i32: 1>} : vector<16x16xi32>
    %cst_28 = arith.constant 1.000000e-01 : f32
    %47 = vector.broadcast %cst_28 : f32 to vector<16x16xf32>
    %48 = arith.cmpf ogt, %44, %47 : vector<16x16xf32>
    %49 = arith.cmpi ne, %45, %46 : vector<16x16xi32>
    %50 = arith.andi %48, %49 : vector<16x16xi1>
    %cst_29 = arith.constant 1.000000e+00 : f32
    %cst_30 = arith.constant 0.000000e+00 : f32
    %51 = vector.broadcast %cst_29 : f32 to vector<16x16xf32>
    %52 = vector.broadcast %cst_30 : f32 to vector<16x16xf32>
    %53 = arith.select %50, %51, %52 : vector<16x16xi1>, vector<16x16xf32>
    %cst_31 = arith.constant dense<0.000000e+00> : vector<16xf32>
    %54 = vector.multi_reduction <add>, %53, %cst_31 [1] : vector<16x16xf32> to vector<16xf32>
    %55 = vector.shape_cast %54 : vector<16xf32> to vector<16x1xf32>
    %cst_32 = arith.constant 1.000000e+00 : f32
    %56 = vector.broadcast %cst_32 : f32 to vector<16x1xf32>
    %57 = arith.maximumf %55, %56 : vector<16x1xf32>
    %58 = tpu.reciprocal %57 : vector<16x1xf32> -> vector<16x1xf32>
    %59 = vector.broadcast %58 : vector<16x1xf32> to vector<16x16xf32>
    %60 = arith.mulf %53, %59 : vector<16x16xf32>
    %c0_33 = arith.constant 0 : index
    %c0_34 = arith.constant 0 : index
    %61 = vector.load %arg9[%c0_33, %c0_34] : memref<16x16xf32, #tpu.memory_space<vmem>>, vector<16x16xf32>
    tpu.vector_store %arg9[%c0_33, %c0_34], %60 {strides = array<i32>} : memref<16x16xf32, #tpu.memory_space<vmem>>, vector<16x16xf32>,
    return
  }
}

</mosaic_0001>

<llo_original>
// kernel: graph_generator_forward.1
$region0: #{graph_generator_forward.1}
  #allocation0 [shape = 'u32[]', space=smem, size = 0x4, offset = 0x4, fixed_abs, tag = 'smem constant byte address 0x4 - core index']
  #allocation1 [shape = 'u32[144,128]{1,0:T(1,128)}', space=vmem, size = 0x12000, scoped, tag = 'internal scratch']
  %s0 = inlined_call_operand.vmem [shape: f32[1,32], index: 0, kind: input, shape index: {}]
  %s1 = inlined_call_operand.vmem [shape: f32[32,128], index: 1, kind: input, shape index: {}]
  %s2 = inlined_call_operand.vmem [shape: f32[1,128], index: 2, kind: input, shape index: {}]
  %s3 = inlined_call_operand.hbm [shape: f32[128,256], index: 3, kind: input, shape index: {}]
  %s4 = inlined_call_operand.vmem [shape: f32[1,256], index: 4, kind: input, shape index: {}]
  %s5 = inlined_call_operand.hbm [shape: f32[256,128], index: 5, kind: input, shape index: {}]
  %s6 = inlined_call_operand.vmem [shape: f32[1,128], index: 6, kind: input, shape index: {}]
  %s7 = inlined_call_operand.vmem [shape: f32[128,8], index: 7, kind: input, shape index: {}]
  %s8 = inlined_call_operand.vmem [shape: f32[16,8], index: 8, kind: output, shape index: {0}]
  %s9 = inlined_call_operand.hbm [shape: f32[16,16], index: 9, kind: output, shape index: {1}]
  %10 = xla_tuple %s8, %s9
  %s11 = sld [smem:[#allocation0]]
  $region58: #{graph_generator_forward.1} parent=0
    _
  %s13 = ssub.s32 1, %s11
  %s14 = scalar_select 0, %s13, %s11
  $region1: #{graph_generator_forward.1} parent=0
    #allocation2 [shape = 'u8[131072]{0}', space=vmem, size = 0x20000, scoped, tag = 'input window, operand 3, single buffered']
    #allocation3 [shape = 's32[1]{0}', space=sflag, size = 0x4, scoped, tag = 'scoped memory for graph_generator_forward.1']
    #allocation4 [shape = 's32[1]{0}', space=sflag, size = 0x4, scoped, tag = 'scoped memory for graph_generator_forward.1']
    #allocation5 [shape = 'u8[131072]{0}', space=vmem, size = 0x20000, scoped, tag = 'input window, operand 5, single buffered']
    #allocation6 [shape = 's32[1]{0}', space=sflag, size = 0x4, scoped, tag = 'scoped memory for graph_generator_forward.1']
    #allocation7 [shape = 'u8[8192]{0}', space=vmem, size = 0x2000, scoped, tag = 'output window, operand 1, single buffered']
    %15 = vsyncpa [#allocation3], 0
    %16 = vsyncpa [#allocation6], 0
    %17 = vsyncpa [#allocation4], 0
    // Predicated region
    $region2: #{graph_generator_forward.1} parent=1 // pred_check
      _
    $region3: #{graph_generator_forward.1} parent=1 // pred_check_branch
      %19 = sbr.rel (0) target = $region5
    $region4: #{graph_generator_forward.1} parent=1 // pred_region
      _
    $region5: #{graph_generator_forward.1} parent=1 // pred_fallthru
      _
    // Predicated region
    $region6: #{graph_generator_forward.1} parent=1 // pred_check
      _
    $region7: #{graph_generator_forward.1} parent=1 // pred_check_branch
      %21 = sbr.rel (0) target = $region9
    $region8: #{graph_generator_forward.1} parent=1 // pred_region
      _
    $region9: #{graph_generator_forward.1} parent=1 // pred_fallthru
      _
    // Predicated region
    $region10: #{graph_generator_forward.1} parent=1 // pred_check
      _
    $region11: #{graph_generator_forward.1} parent=1 // pred_check_branch
      %23 = sbr.rel (0) target = $region13
    $region12: #{graph_generator_forward.1} parent=1 // pred_region
      _
    $region13: #{graph_generator_forward.1} parent=1 // pred_fallthru
      _
    // Predicated region
    $region14: #{graph_generator_forward.1} parent=1 // pred_check
      _
    $region15: #{graph_generator_forward.1} parent=1 // pred_check_branch
      %25 = sbr.rel (0) target = $region17
    $region16: #{graph_generator_forward.1} parent=1 // pred_region
      %s27 = ssub.s32 4096, 4096
      %28 = vsyncadd [#allocation3], %s27
      %s29 = sshll.u32 [#allocation2], 4
      %s30 = int_to_ptr.vmem [resolvable:$true] %s29
      %35 = dma.hbm_to_vmem [thread:$0]  %s3, 4096, %s30, [#allocation3], 256, 256, 16
    $region17: #{graph_generator_forward.1} parent=1 // pred_fallthru
      _
    // Predicated region
    $region18: #{graph_generator_forward.1} parent=1 // pred_check
      _
    $region19: #{graph_generator_forward.1} parent=1 // pred_check_branch
      %37 = sbr.rel (0) target = $region21
    $region20: #{graph_generator_forward.1} parent=1 // pred_region
      _
    $region21: #{graph_generator_forward.1} parent=1 // pred_fallthru
      _
    // Predicated region
    $region22: #{graph_generator_forward.1} parent=1 // pred_check
      _
    $region23: #{graph_generator_forward.1} parent=1 // pred_check_branch
      %39 = sbr.rel (0) target = $region25
    $region24: #{graph_generator_forward.1} parent=1 // pred_region
      %s41 = ssub.s32 4096, 4096
      %42 = vsyncadd [#allocation6], %s41
      %s43 = sshll.u32 [#allocation5], 4
      %s44 = int_to_ptr.vmem [resolvable:$true] %s43
      %49 = dma.hbm_to_vmem [thread:$0]  %s5, 4096, %s44, [#allocation6], 128, 128, 8
    $region25: #{graph_generator_forward.1} parent=1 // pred_fallthru
      _
    // Predicated region
    $region26: #{graph_generator_forward.1} parent=1 // pred_check
      _
    $region27: #{graph_generator_forward.1} parent=1 // pred_check_branch
      %51 = sbr.rel (0) target = $region29
    $region28: #{graph_generator_forward.1} parent=1 // pred_region
      _
    $region29: #{graph_generator_forward.1} parent=1 // pred_fallthru
      _
    // Predicated region
    $region30: #{graph_generator_forward.1} parent=1 // pred_check
      _
    $region31: #{graph_generator_forward.1} parent=1 // pred_check_branch
      %53 = sbr.rel (0) target = $region33
    $region32: #{graph_generator_forward.1} parent=1 // pred_region
      _
    $region33: #{graph_generator_forward.1} parent=1 // pred_fallthru
      _
    // Predicated region
    $region34: #{graph_generator_forward.1} parent=1 // pred_check
      _
    $region35: #{graph_generator_forward.1} parent=1 // pred_check_branch
      %55 = sbr.rel (0) target = $region37
    $region36: #{graph_generator_forward.1} parent=1 // pred_region
      %56 = dma.done [#allocation3], 4096
    $region37: #{graph_generator_forward.1} parent=1 // pred_fallthru
      _
    // Predicated region
    $region38: #{graph_generator_forward.1} parent=1 // pred_check
      _
    $region39: #{graph_generator_forward.1} parent=1 // pred_check_branch
      %58 = sbr.rel (0) target = $region41
    $region40: #{graph_generator_forward.1} parent=1 // pred_region
      %59 = dma.done [#allocation6], 4096
    $region41: #{graph_generator_forward.1} parent=1 // pred_fallthru
      _
    %v60 = vld [vmem:[%s0] sm:$0x1]
    %v61 = vld [vmem:[%s1] sm:$0xff]
    %v62 = vld [vmem:[%s1 + $0x8] sm:$0xff]
    %v63 = vld [vmem:[%s1 + $0x10] sm:$0xff]
    %v64 = vld [vmem:[%s1 + $0x18] sm:$0xff]
    %v65 = vld [vmem:[%s2] sm:$0x1]
    %vm66 = vcmask 261120
    %v68 = vsel %vm66, %v60, 0
    %70 = vmatprep.subr.mxu0 0.0
    %71 = vmatpush1.msra.mxu0 %v61
    %72 = vmatprep.subr.mxu0 0.0
    %73 = vmatpush1.msra.mxu0 %v62
    %74 = vmatprep.subr.mxu0 0.0
    %75 = vmatpush1.msra.mxu0 %v63
    %76 = vmatprep.subr.mxu0 0.0
    %77 = vmatpush1.msra.mxu0 %v64
    %78 = vmatprep.subr.mxu0 0.0
    %79 = vmatpush1.msra.mxu0 0.0
    %80 = vmatprep.subr.mxu0 0.0
    %81 = vmatpush1.msra.mxu0 0.0
    %82 = vmatprep.subr.mxu0 0.0
    %83 = vmatpush1.msra.mxu0 0.0
    %84 = vmatprep.subr.mxu0 0.0
    %85 = vmatpush1.msra.mxu0 0.0
    %86 = vmatprep.subr.mxu0 0.0
    %87 = vmatpush1.msra.mxu0 0.0
    %88 = vmatprep.subr.mxu0 0.0
    %89 = vmatpush1.msra.mxu0 0.0
    %90 = vmatprep.subr.mxu0 0.0
    %91 = vmatpush1.msra.mxu0 0.0
    %92 = vmatprep.subr.mxu0 0.0
    %93 = vmatpush1.msra.mxu0 0.0
    %94 = vmatprep.subr.mxu0 0.0
    %95 = vmatpush1.msra.mxu0 0.0
    %96 = vmatprep.subr.mxu0 0.0
    %97 = vmatpush1.msra.mxu0 0.0
    %98 = vmatprep.subr.mxu0 0.0
    %99 = vmatpush1.msra.mxu0 0.0
    %100 = vmatprep.subr.mxu0 0.0
    %101 = vmatpush1.msra.mxu0 0.0
    %102 = vmatprep.subr.mxu0 0.0
    %103 = vmatpush1.msra.mxu0 0.0
    %104 = vmatprep.subr.mxu0 0.0
    %105 = vmatpush1.msra.mxu0 0.0
    %106 = vmatprep.subr.mxu0 0.0
    %107 = vmatpush1.msra.mxu0 0.0
    %108 = vmatprep.subr.mxu0 0.0
    %109 = vmatpush1.msra.mxu0 0.0
    %110 = vmatprep.subr.mxu0 0.0
    %111 = vmatpush1.msra.mxu0 0.0
    %112 = vmatprep.subr.mxu0 0.0
    %113 = vmatpush1.msra.mxu0 0.0
    %114 = vmatprep.subr.mxu0 0.0
    %115 = vmatpush1.msra.mxu0 0.0
    %116 = vmatprep.subr.mxu0 0.0
    %117 = vmatpush1.msra.mxu0 0.0
    %118 = vmatprep.subr.mxu0 0.0
    %119 = vmatpush1.msra.mxu0 0.0
    %120 = vmatprep.subr.mxu0 0.0
    %121 = vmatpush1.msra.mxu0 0.0
    %122 = vmatprep.subr.mxu0 0.0
    %123 = vmatpush1.msra.mxu0 0.0
    %124 = vmatprep.subr.mxu0 0.0
    %125 = vmatpush1.msra.mxu0 0.0
    %126 = vmatprep.subr.mxu0 0.0
    %127 = vmatpush1.msra.mxu0 0.0
    %128 = vmatprep.subr.mxu0 0.0
    %129 = vmatpush1.msra.mxu0 0.0
    %130 = vmatprep.subr.mxu0 0.0
    %131 = vmatpush1.msra.mxu0 0.0
    %132 = vmatprep.subr.mxu0 0.0
    %133 = vmatpush1.msra.mxu0 0.0
    %134 = vmatprep.mubr.f32.mxu0 0.0
    %135 = vmatmul.mubr.f32.gmra.mrb[0].mxu0 %v68
    %v136 = vpop.f32.mrb[0].mxu0
    %v137 = vadd.f32 %v65, %v136
    %v138 = vpop.f32.mrb[0].mxu0
    %139 = vdwg.mxu0
    %v140 = vmax.f32 %v137, 0.0
    %v141 = vld [vmem:[#allocation2] sm:$0xff]
    %v142 = vld [vmem:[#allocation2 + $0x8] sm:$0xff]
    %v143 = vld [vmem:[#allocation2 + $0x10] sm:$0xff]
    %v144 = vld [vmem:[#allocation2 + $0x18] sm:$0xff]
    %v145 = vld [vmem:[#allocation2 + $0x20] sm:$0xff]
    %v146 = vld [vmem:[#allocation2 + $0x28] sm:$0xff]
    %v147 = vld [vmem:[#allocation2 + $0x30] sm:$0xff]
    %v148 = vld [vmem:[#allocation2 + $0x38] sm:$0xff]
    %v149 = vld [vmem:[#allocation2 + $0x40] sm:$0xff]
    %v150 = vld [vmem:[#allocation2 + $0x48] sm:$0xff]
    %v151 = vld [vmem:[#allocation2 + $0x50] sm:$0xff]
    %v152 = vld [vmem:[#allocation2 + $0x58] sm:$0xff]
    %v153 = vld [vmem:[#allocation2 + $0x60] sm:$0xff]
    %v154 = vld [vmem:[#allocation2 + $0x68] sm:$0xff]
    %v155 = vld [vmem:[#allocation2 + $0x70] sm:$0xff]
    %v156 = vld [vmem:[#allocation2 + $0x78] sm:$0xff]
    %v157 = vld [vmem:[#allocation2 + $0x80] sm:$0xff]
    %v158 = vld [vmem:[#allocation2 + $0x88] sm:$0xff]
    %v159 = vld [vmem:[#allocation2 + $0x90] sm:$0xff]
    %v160 = vld [vmem:[#allocation2 + $0x98] sm:$0xff]
    %v161 = vld [vmem:[#allocation2 + $0xa0] sm:$0xff]
    %v162 = vld [vmem:[#allocation2 + $0xa8] sm:$0xff]
    %v163 = vld [vmem:[#allocation2 + $0xb0] sm:$0xff]
    %v164 = vld [vmem:[#allocation2 + $0xb8] sm:$0xff]
    %v165 = vld [vmem:[#allocation2 + $0xc0] sm:$0xff]
    %v166 = vld [vmem:[#allocation2 + $0xc8] sm:$0xff]
    %v167 = vld [vmem:[#allocation2 + $0xd0] sm:$0xff]
    %v168 = vld [vmem:[#allocation2 + $0xd8] sm:$0xff]
    %v169 = vld [vmem:[#allocation2 + $0xe0] sm:$0xff]
    %v170 = vld [vmem:[#allocation2 + $0xe8] sm:$0xff]
    %v171 = vld [vmem:[#allocation2 + $0xf0] sm:$0xff]
    %v172 = vld [vmem:[#allocation2 + $0xf8] sm:$0xff]
    %v173 = vld [vmem:[%s4] sm:$0x3]
    %v175 = vlaneseq
    %v176 = vshrl.u32 %v175, 7
    %v177 = vsub.s32 0, %v176
    %v178 = vrot.slane %v173, %v177
    %v179 = vlaneseq
    %v180 = vshrl.u32 %v179, 7
    %v181 = vsub.s32 1, %v180
    %v182 = vrot.slane %v173, %v181
    %185 = vmatprep.subr.mxu0 %v142
    %186 = vmatpush1.msra.mxu0 %v141
    %187 = vmatprep.subr.mxu0 %v144
    %188 = vmatpush1.msra.mxu0 %v143
    %189 = vmatprep.subr.mxu0 %v146
    %190 = vmatpush1.msra.mxu0 %v145
    %191 = vmatprep.subr.mxu0 %v148
    %192 = vmatpush1.msra.mxu0 %v147
    %193 = vmatprep.subr.mxu0 %v150
    %194 = vmatpush1.msra.mxu0 %v149
    %195 = vmatprep.subr.mxu0 %v152
    %196 = vmatpush1.msra.mxu0 %v151
    %197 = vmatprep.subr.mxu0 %v154
    %198 = vmatpush1.msra.mxu0 %v153
    %199 = vmatprep.subr.mxu0 %v156
    %200 = vmatpush1.msra.mxu0 %v155
    %201 = vmatprep.subr.mxu0 %v158
    %202 = vmatpush1.msra.mxu0 %v157
    %203 = vmatprep.subr.mxu0 %v160
    %204 = vmatpush1.msra.mxu0 %v159
    %205 = vmatprep.subr.mxu0 %v162
    %206 = vmatpush1.msra.mxu0 %v161
    %207 = vmatprep.subr.mxu0 %v164
    %208 = vmatpush1.msra.mxu0 %v163
    %209 = vmatprep.subr.mxu0 %v166
    %210 = vmatpush1.msra.mxu0 %v165
    %211 = vmatprep.subr.mxu0 %v168
    %212 = vmatpush1.msra.mxu0 %v167
    %213 = vmatprep.subr.mxu0 %v170
    %214 = vmatpush1.msra.mxu0 %v169
    %215 = vmatprep.subr.mxu0 %v172
    %216 = vmatpush1.msra.mxu0 %v171
    %217 = vmatprep.subr.mxu0 0.0
    %218 = vmatpush1.msra.mxu0 0.0
    %219 = vmatprep.subr.mxu0 0.0
    %220 = vmatpush1.msra.mxu0 0.0
    %221 = vmatprep.subr.mxu0 0.0
    %222 = vmatpush1.msra.mxu0 0.0
    %223 = vmatprep.subr.mxu0 0.0
    %224 = vmatpush1.msra.mxu0 0.0
    %225 = vmatprep.subr.mxu0 0.0
    %226 = vmatpush1.msra.mxu0 0.0
    %227 = vmatprep.subr.mxu0 0.0
    %228 = vmatpush1.msra.mxu0 0.0
    %229 = vmatprep.subr.mxu0 0.0
    %230 = vmatpush1.msra.mxu0 0.0
    %231 = vmatprep.subr.mxu0 0.0
    %232 = vmatpush1.msra.mxu0 0.0
    %233 = vmatprep.subr.mxu0 0.0
    %234 = vmatpush1.msra.mxu0 0.0
    %235 = vmatprep.subr.mxu0 0.0
    %236 = vmatpush1.msra.mxu0 0.0
    %237 = vmatprep.subr.mxu0 0.0
    %238 = vmatpush1.msra.mxu0 0.0
    %239 = vmatprep.subr.mxu0 0.0
    %240 = vmatpush1.msra.mxu0 0.0
    %241 = vmatprep.subr.mxu0 0.0
    %242 = vmatpush1.msra.mxu0 0.0
    %243 = vmatprep.subr.mxu0 0.0
    %244 = vmatpush1.msra.mxu0 0.0
    %245 = vmatprep.subr.mxu0 0.0
    %246 = vmatpush1.msra.mxu0 0.0
    %247 = vmatprep.subr.mxu0 0.0
    %248 = vmatpush1.msra.mxu0 0.0
    %249 = vmatprep.mubr.f32.mxu0 0.0
    %250 = vmatmul.mubr.f32.gmra.mrb[0].mxu0 %v140
    %v251 = vpop.f32.mrb[0].mxu0
    %v252 = vadd.f32 %v178, %v251
    %v253 = vpop.f32.mrb[0].mxu0
    %v254 = vadd.f32 %v182, %v253
    %255 = vdwg.mxu0
    %v256 = vmax.f32 %v252, 0.0
    %v257 = vmax.f32 %v254, 0.0
    %v258 = vld [vmem:[#allocation5] sm:$0xff]
    %v259 = vld [vmem:[#allocation5 + $0x8] sm:$0xff]
    %v260 = vld [vmem:[#allocation5 + $0x10] sm:$0xff]
    %v261 = vld [vmem:[#allocation5 + $0x18] sm:$0xff]
    %v262 = vld [vmem:[#allocation5 + $0x20] sm:$0xff]
    %v263 = vld [vmem:[#allocation5 + $0x28] sm:$0xff]
    %v264 = vld [vmem:[#allocation5 + $0x30] sm:$0xff]
    %v265 = vld [vmem:[#allocation5 + $0x38] sm:$0xff]
    %v266 = vld [vmem:[#allocation5 + $0x40] sm:$0xff]
    %v267 = vld [vmem:[#allocation5 + $0x48] sm:$0xff]
    %v268 = vld [vmem:[#allocation5 + $0x50] sm:$0xff]
    %v269 = vld [vmem:[#allocation5 + $0x58] sm:$0xff]
    %v270 = vld [vmem:[#allocation5 + $0x60] sm:$0xff]
    %v271 = vld [vmem:[#allocation5 + $0x68] sm:$0xff]
    %v272 = vld [vmem:[#allocation5 + $0x70] sm:$0xff]
    %v273 = vld [vmem:[#allocation5 + $0x78] sm:$0xff]
    %v274 = vld [vmem:[#allocation5 + $0x80] sm:$0xff]
    %v275 = vld [vmem:[#allocation5 + $0x88] sm:$0xff]
    %v276 = vld [vmem:[#allocation5 + $0x90] sm:$0xff]
    %v277 = vld [vmem:[#allocation5 + $0x98] sm:$0xff]
    %v278 = vld [vmem:[#allocation5 + $0xa0] sm:$0xff]
    %v279 = vld [vmem:[#allocation5 + $0xa8] sm:$0xff]
    %v280 = vld [vmem:[#allocation5 + $0xb0] sm:$0xff]
    %v281 = vld [vmem:[#allocation5 + $0xb8] sm:$0xff]
    %v282 = vld [vmem:[#allocation5 + $0xc0] sm:$0xff]
    %v283 = vld [vmem:[#allocation5 + $0xc8] sm:$0xff]
    %v284 = vld [vmem:[#allocation5 + $0xd0] sm:$0xff]
    %v285 = vld [vmem:[#allocation5 + $0xd8] sm:$0xff]
    %v286 = vld [vmem:[#allocation5 + $0xe0] sm:$0xff]
    %v287 = vld [vmem:[#allocation5 + $0xe8] sm:$0xff]
    %v288 = vld [vmem:[#allocation5 + $0xf0] sm:$0xff]
    %v289 = vld [vmem:[#allocation5 + $0xf8] sm:$0xff]
    %v290 = vld [vmem:[%s6] sm:$0x1]
    %291 = vmatprep.subr.mxu0 0.0
    %292 = vmatpush1.msra.mxu0 %v258
    %293 = vmatprep.subr.mxu0 0.0
    %294 = vmatpush1.msra.mxu0 %v259
    %295 = vmatprep.subr.mxu0 0.0
    %296 = vmatpush1.msra.mxu0 %v260
    %297 = vmatprep.subr.mxu0 0.0
    %298 = vmatpush1.msra.mxu0 %v261
    %299 = vmatprep.subr.mxu0 0.0
    %300 = vmatpush1.msra.mxu0 %v262
    %301 = vmatprep.subr.mxu0 0.0
    %302 = vmatpush1.msra.mxu0 %v263
    %303 = vmatprep.subr.mxu0 0.0
    %304 = vmatpush1.msra.mxu0 %v264
    %305 = vmatprep.subr.mxu0 0.0
    %306 = vmatpush1.msra.mxu0 %v265
    %307 = vmatprep.subr.mxu0 0.0
    %308 = vmatpush1.msra.mxu0 %v266
    %309 = vmatprep.subr.mxu0 0.0
    %310 = vmatpush1.msra.mxu0 %v267
    %311 = vmatprep.subr.mxu0 0.0
    %312 = vmatpush1.msra.mxu0 %v268
    %313 = vmatprep.subr.mxu0 0.0
    %314 = vmatpush1.msra.mxu0 %v269
    %315 = vmatprep.subr.mxu0 0.0
    %316 = vmatpush1.msra.mxu0 %v270
    %317 = vmatprep.subr.mxu0 0.0
    %318 = vmatpush1.msra.mxu0 %v271
    %319 = vmatprep.subr.mxu0 0.0
    %320 = vmatpush1.msra.mxu0 %v272
    %321 = vmatprep.subr.mxu0 0.0
    %322 = vmatpush1.msra.mxu0 %v273
    %323 = vmatprep.subr.mxu0 0.0
    %324 = vmatpush1.msra.mxu0 %v274
    %325 = vmatprep.subr.mxu0 0.0
    %326 = vmatpush1.msra.mxu0 %v275
    %327 = vmatprep.subr.mxu0 0.0
    %328 = vmatpush1.msra.mxu0 %v276
    %329 = vmatprep.subr.mxu0 0.0
    %330 = vmatpush1.msra.mxu0 %v277
    %331 = vmatprep.subr.mxu0 0.0
    %332 = vmatpush1.msra.mxu0 %v278
    %333 = vmatprep.subr.mxu0 0.0
    %334 = vmatpush1.msra.mxu0 %v279
    %335 = vmatprep.subr.mxu0 0.0
    %336 = vmatpush1.msra.mxu0 %v280
    %337 = vmatprep.subr.mxu0 0.0
    %338 = vmatpush1.msra.mxu0 %v281
    %339 = vmatprep.subr.mxu0 0.0
    %340 = vmatpush1.msra.mxu0 %v282
    %341 = vmatprep.subr.mxu0 0.0
    %342 = vmatpush1.msra.mxu0 %v283
    %343 = vmatprep.subr.mxu0 0.0
    %344 = vmatpush1.msra.mxu0 %v284
    %345 = vmatprep.subr.mxu0 0.0
    %346 = vmatpush1.msra.mxu0 %v285
    %347 = vmatprep.subr.mxu0 0.0
    %348 = vmatpush1.msra.mxu0 %v286
    %349 = vmatprep.subr.mxu0 0.0
    %350 = vmatpush1.msra.mxu0 %v287
    %351 = vmatprep.subr.mxu0 0.0
    %352 = vmatpush1.msra.mxu0 %v288
    %353 = vmatprep.subr.mxu0 0.0
    %354 = vmatpush1.msra.mxu0 %v289
    %355 = vmatprep.mubr.f32.mxu0 %v257
    %356 = vmatmul.mubr.f32.gmra.mrb[0].mxu0 %v256
    %v357 = vpop.f32.mrb[0].mxu0
    %v358 = vadd.f32 %v290, %v357
    %v359 = vpop.f32.mrb[0].mxu0
    %360 = vdwg.mxu0
    %v361 = vtanh.pop %v358
    %v362 = vlaneseq
    %v363 = vshrl.u32 %v362, 7
    %v364 = vadd.s32 %v363, 8
    %v365 = vlaneseq
    %v366 = vand.u32 %v365, 127
    %v367 = vmul.u32 %v363, 8
    %v368 = vmul.u32 %v364, 8
    %vm369 = vcmp.ge.s32.totalorder %v366, %v367
    %vm370 = vcmp.ge.s32.totalorder %v366, %v368
    %v371 = vadd.s32 %v367, 8
    %v372 = vadd.s32 %v368, 8
    %vm373 = vcmp.lt.s32.totalorder %v366, %v371
    %vm374 = vcmp.lt.s32.totalorder %v366, %v372
    %vm375 = vmand %vm369, %vm373
    %vm376 = vmand %vm370, %vm374
    %v377 = vlaneseq
    %v378 = vshrl.u32 %v377, 7
    %v379 = vsub.s32 0, %v378
    %v380 = vrot.slane %v361, %v379
    %v381 = vsel %vm375, %v380, 0.0
    %v382 = vsel %vm376, %v380, 0.0
    %v383 = vld [vmem:[%s7] sm:$0xff]
    %v384 = vld [vmem:[%s7 + $0x8] sm:$0xff]
    %v385 = vld [vmem:[%s7 + $0x10] sm:$0xff]
    %v386 = vld [vmem:[%s7 + $0x18] sm:$0xff]
    %v387 = vld [vmem:[%s7 + $0x20] sm:$0xff]
    %v388 = vld [vmem:[%s7 + $0x28] sm:$0xff]
    %v389 = vld [vmem:[%s7 + $0x30] sm:$0xff]
    %v390 = vld [vmem:[%s7 + $0x38] sm:$0xff]
    %v391 = vld [vmem:[%s7 + $0x40] sm:$0xff]
    %v392 = vld [vmem:[%s7 + $0x48] sm:$0xff]
    %v393 = vld [vmem:[%s7 + $0x50] sm:$0xff]
    %v394 = vld [vmem:[%s7 + $0x58] sm:$0xff]
    %v395 = vld [vmem:[%s7 + $0x60] sm:$0xff]
    %v396 = vld [vmem:[%s7 + $0x68] sm:$0xff]
    %v397 = vld [vmem:[%s7 + $0x70] sm:$0xff]
    %v398 = vld [vmem:[%s7 + $0x78] sm:$0xff]
    %399 = vmatprep.subr.mxu0 0.0
    %400 = vmatpush1.msra.mxu0 %v383
    %401 = vmatprep.subr.mxu0 0.0
    %402 = vmatpush1.msra.mxu0 %v384
    %403 = vmatprep.subr.mxu0 0.0
    %404 = vmatpush1.msra.mxu0 %v385
    %405 = vmatprep.subr.mxu0 0.0
    %406 = vmatpush1.msra.mxu0 %v386
    %407 = vmatprep.subr.mxu0 0.0
    %408 = vmatpush1.msra.mxu0 %v387
    %409 = vmatprep.subr.mxu0 0.0
    %410 = vmatpush1.msra.mxu0 %v388
    %411 = vmatprep.subr.mxu0 0.0
    %412 = vmatpush1.msra.mxu0 %v389
    %413 = vmatprep.subr.mxu0 0.0
    %414 = vmatpush1.msra.mxu0 %v390
    %415 = vmatprep.subr.mxu0 0.0
    %416 = vmatpush1.msra.mxu0 %v391
    %417 = vmatprep.subr.mxu0 0.0
    %418 = vmatpush1.msra.mxu0 %v392
    %419 = vmatprep.subr.mxu0 0.0
    %420 = vmatpush1.msra.mxu0 %v393
    %421 = vmatprep.subr.mxu0 0.0
    %422 = vmatpush1.msra.mxu0 %v394
    %423 = vmatprep.subr.mxu0 0.0
    %424 = vmatpush1.msra.mxu0 %v395
    %425 = vmatprep.subr.mxu0 0.0
    %426 = vmatpush1.msra.mxu0 %v396
    %427 = vmatprep.subr.mxu0 0.0
    %428 = vmatpush1.msra.mxu0 %v397
    %429 = vmatprep.subr.mxu0 0.0
    %430 = vmatpush1.msra.mxu0 %v398
    %431 = vmatprep.subr.mxu0 0.0
    %432 = vmatpush1.msra.mxu0 0.0
    %433 = vmatprep.subr.mxu0 0.0
    %434 = vmatpush1.msra.mxu0 0.0
    %435 = vmatprep.subr.mxu0 0.0
    %436 = vmatpush1.msra.mxu0 0.0
    %437 = vmatprep.subr.mxu0 0.0
    %438 = vmatpush1.msra.mxu0 0.0
    %439 = vmatprep.subr.mxu0 0.0
    %440 = vmatpush1.msra.mxu0 0.0
    %441 = vmatprep.subr.mxu0 0.0
    %442 = vmatpush1.msra.mxu0 0.0
    %443 = vmatprep.subr.mxu0 0.0
    %444 = vmatpush1.msra.mxu0 0.0
    %445 = vmatprep.subr.mxu0 0.0
    %446 = vmatpush1.msra.mxu0 0.0
    %447 = vmatprep.subr.mxu0 0.0
    %448 = vmatpush1.msra.mxu0 0.0
    %449 = vmatprep.subr.mxu0 0.0
    %450 = vmatpush1.msra.mxu0 0.0
    %451 = vmatprep.subr.mxu0 0.0
    %452 = vmatpush1.msra.mxu0 0.0
    %453 = vmatprep.subr.mxu0 0.0
    %454 = vmatpush1.msra.mxu0 0.0
    %455 = vmatprep.subr.mxu0 0.0
    %456 = vmatpush1.msra.mxu0 0.0
    %457 = vmatprep.subr.mxu0 0.0
    %458 = vmatpush1.msra.mxu0 0.0
    %459 = vmatprep.subr.mxu0 0.0
    %460 = vmatpush1.msra.mxu0 0.0
    %461 = vmatprep.subr.mxu0 0.0
    %462 = vmatpush1.msra.mxu0 0.0
    %463 = vmatprep.mubr.f32.mxu0 0.0
    %464 = vmatmul.mubr.f32.gmra.mrb[0].mxu0 %v381
    %v465 = vpop.f32.mrb[0].mxu0
    %v466 = vadd.f32 0.0, %v465
    %v467 = vpop.f32.mrb[0].mxu0
    %468 = vmatprep.mubr.f32.mxu0 0.0
    %469 = vmatmul.mubr.f32.gmra.mrb[0].mxu0 %v382
    %v470 = vpop.f32.mrb[0].mxu0
    %v471 = vadd.f32 0.0, %v470
    %v472 = vpop.f32.mrb[0].mxu0
    %473 = vdwg.mxu0
    %vm474 = vcmask 64512
    %475 = vst.msk [vmem:[%s8] sm:$0xff] %vm474, %v466
    %476 = vst.msk [vmem:[%s8 + $0x8] sm:$0xff] %vm474, %v471
    %v477 = vmul.f32 %v466, %v466
    %v478 = vmul.f32 %v471, %v471
    %v479 = vsel %vm474, %v477, 0.0
    %480 = vadd.xlane.f32.xlu0 %v479
    %v481 = vpop.xlane.xlu0 %480
    %v482 = vsel %vm474, %v478, 0.0
    %483 = vadd.xlane.f32.xlu0 %v482
    %v484 = vpop.xlane.xlu0 %483
    %v485 = vmax.f32 %v481, 1e-24
    %v486 = vmax.f32 %v484, 1e-24
    %v487 = vrsqrt.pop %v485
    %v488 = vrsqrt.pop %v486
    %v489 = vmul.f32 %v466, %v487
    %v490 = vmul.f32 %v471, %v488
    %v492 = vsel %vm474, %v489, 0
    %v495 = vsel %vm474, %v490, 0
    %497 = vmatprep.subr.mxu0 0.0
    %498 = vmatpush1.xpose.msra.mxu0 %v492
    %499 = vmatprep.subr.mxu0 0.0
    %500 = vmatpush1.xpose.msra.mxu0 %v495
    %501 = vmatprep.subr.mxu0 0.0
    %502 = vmatpush1.xpose.msra.mxu0 0.0
    %503 = vmatprep.subr.mxu0 0.0
    %504 = vmatpush1.xpose.msra.mxu0 0.0
    %505 = vmatprep.subr.mxu0 0.0
    %506 = vmatpush1.xpose.msra.mxu0 0.0
    %507 = vmatprep.subr.mxu0 0.0
    %508 = vmatpush1.xpose.msra.mxu0 0.0
    %509 = vmatprep.subr.mxu0 0.0
    %510 = vmatpush1.xpose.msra.mxu0 0.0
    %511 = vmatprep.subr.mxu0 0.0
    %512 = vmatpush1.xpose.msra.mxu0 0.0
    %513 = vmatprep.subr.mxu0 0.0
    %514 = vmatpush1.xpose.msra.mxu0 0.0
    %515 = vmatprep.subr.mxu0 0.0
    %516 = vmatpush1.xpose.msra.mxu0 0.0
    %517 = vmatprep.subr.mxu0 0.0
    %518 = vmatpush1.xpose.msra.mxu0 0.0
    %519 = vmatprep.subr.mxu0 0.0
    %520 = vmatpush1.xpose.msra.mxu0 0.0
    %521 = vmatprep.subr.mxu0 0.0
    %522 = vmatpush1.xpose.msra.mxu0 0.0
    %523 = vmatprep.subr.mxu0 0.0
    %524 = vmatpush1.xpose.msra.mxu0 0.0
    %525 = vmatprep.subr.mxu0 0.0
    %526 = vmatpush1.xpose.msra.mxu0 0.0
    %527 = vmatprep.subr.mxu0 0.0
    %528 = vmatpush1.xpose.msra.mxu0 0.0
    %529 = vmatprep.subr.mxu0 0.0
    %530 = vmatpush1.xpose.msra.mxu0 0.0
    %531 = vmatprep.subr.mxu0 0.0
    %532 = vmatpush1.xpose.msra.mxu0 0.0
    %533 = vmatprep.subr.mxu0 0.0
    %534 = vmatpush1.xpose.msra.mxu0 0.0
    %535 = vmatprep.subr.mxu0 0.0
    %536 = vmatpush1.xpose.msra.mxu0 0.0
    %537 = vmatprep.subr.mxu0 0.0
    %538 = vmatpush1.xpose.msra.mxu0 0.0
    %539 = vmatprep.subr.mxu0 0.0
    %540 = vmatpush1.xpose.msra.mxu0 0.0
    %541 = vmatprep.subr.mxu0 0.0
    %542 = vmatpush1.xpose.msra.mxu0 0.0
    %543 = vmatprep.subr.mxu0 0.0
    %544 = vmatpush1.xpose.msra.mxu0 0.0
    %545 = vmatprep.subr.mxu0 0.0
    %546 = vmatpush1.xpose.msra.mxu0 0.0
    %547 = vmatprep.subr.mxu0 0.0
    %548 = vmatpush1.xpose.msra.mxu0 0.0
    %549 = vmatprep.subr.mxu0 0.0
    %550 = vmatpush1.xpose.msra.mxu0 0.0
    %551 = vmatprep.subr.mxu0 0.0
    %552 = vmatpush1.xpose.msra.mxu0 0.0
    %553 = vmatprep.subr.mxu0 0.0
    %554 = vmatpush1.xpose.msra.mxu0 0.0
    %555 = vmatprep.subr.mxu0 0.0
    %556 = vmatpush1.xpose.msra.mxu0 0.0
    %557 = vmatprep.subr.mxu0 0.0
    %558 = vmatpush1.xpose.msra.mxu0 0.0
    %559 = vmatprep.subr.mxu0 0.0
    %560 = vmatpush1.xpose.msra.mxu0 0.0
    %561 = vmatprep.mubr.f32.mxu0 0.0
    %562 = vmatmul.mubr.f32.gmra.mrb[0].mxu0 %v492
    %v563 = vpop.f32.mrb[0].mxu0
    %v564 = vadd.f32 0.0, %v563
    %v565 = vpop.f32.mrb[0].mxu0
    %566 = vmatprep.mubr.f32.mxu0 0.0
    %567 = vmatmul.mubr.f32.gmra.mrb[0].mxu0 %v495
    %v568 = vpop.f32.mrb[0].mxu0
    %v569 = vadd.f32 0.0, %v568
    %v570 = vpop.f32.mrb[0].mxu0
    %571 = vdwg.mxu0
    %vm572 = vcmp.gt.f32.partialorder %v564, 0.1
    %vm573 = vcmp.gt.f32.partialorder %v569, 0.1
    %vm574 = vcmp.ne.s32.totalorder %v363, %v366
    %vm575 = vcmp.ne.s32.totalorder %v364, %v366
    %vm576 = vmand %vm572, %vm574
    %vm577 = vmand %vm573, %vm575
    %v578 = vsel %vm576, 1.0, 0.0
    %v579 = vsel %vm577, 1.0, 0.0
    %vm580 = vcmask 130048
    %v581 = vsel %vm580, %v578, 0.0
    %582 = vadd.xlane.f32.xlu0 %v581
    %v583 = vpop.xlane.xlu0 %582
    %v584 = vsel %vm580, %v579, 0.0
    %585 = vadd.xlane.f32.xlu0 %v584
    %v586 = vpop.xlane.xlu0 %585
    %v587 = vmax.f32 %v583, 1.0
    %v588 = vmax.f32 %v586, 1.0
    %v589 = vrcp.pop %v587
    %v590 = vrcp.pop %v588
    %v591 = vmul.f32 %v578, %v589
    %v592 = vmul.f32 %v579, %v590
    %593 = vst.msk [vmem:[#allocation7] sm:$0xff] %vm580, %v591
    %594 = vst.msk [vmem:[#allocation7 + $0x8] sm:$0xff] %vm580, %v592
    // Predicated region
    $region42: #{graph_generator_forward.1} parent=1 // pred_check
      _
    $region43: #{graph_generator_forward.1} parent=1 // pred_check_branch
      %596 = sbr.rel (0) target = $region45
    $region44: #{graph_generator_forward.1} parent=1 // pred_region
      _
    $region45: #{graph_generator_forward.1} parent=1 // pred_fallthru
      _
    // Predicated region
    $region46: #{graph_generator_forward.1} parent=1 // pred_check
      _
    $region47: #{graph_generator_forward.1} parent=1 // pred_check_branch
      %598 = sbr.rel (0) target = $region49
    $region48: #{graph_generator_forward.1} parent=1 // pred_region
      %s600 = ssub.s32 256, 256
      %601 = vsyncadd [#allocation4], %s600
      %s602 = sshll.u32 [#allocation7], 4
      %s603 = int_to_ptr.vmem [resolvable:$true] %s602
      %608 = dma.vmem_to_hbm [thread:$0]  %s603, 256, %s9, [#allocation4], 128, 128, 8
    $region49: #{graph_generator_forward.1} parent=1 // pred_fallthru
      _
    // Predicated region
    $region50: #{graph_generator_forward.1} parent=1 // pred_check
      _
    $region51: #{graph_generator_forward.1} parent=1 // pred_check_branch
      %610 = sbr.rel (0) target = $region53
    $region52: #{graph_generator_forward.1} parent=1 // pred_region
      _
    $region53: #{graph_generator_forward.1} parent=1 // pred_fallthru
      _
    // Predicated region
    $region54: #{graph_generator_forward.1} parent=1 // pred_check
      _
    $region55: #{graph_generator_forward.1} parent=1 // pred_check_branch
      %612 = sbr.rel (0) target = $region57
    $region56: #{graph_generator_forward.1} parent=1 // pred_region
      %613 = dma.done [#allocation4], 256
    $region57: #{graph_generator_forward.1} parent=1 // pred_fallthru
      _
    %614 = vsyncpa [#allocation3], 1
    %615 = vsyncpa [#allocation6], 1
    %616 = vsyncpa [#allocation4], 1

</llo_original>
